<compile_context>
chip_gen: v6e
topology: v6e:2x2x1
jax: 0.10.0
libtpu: 0.0.40
codegen_flags: <defaults>
</compile_context>

<pallas_src>
import functools

import jax
import jax.numpy as jnp
from jax import lax
from jax.experimental import pallas as pl
from jax.experimental.pallas import tpu as pltpu

F_PAD = 8                 # 5-wide feature dims padded to one sublane group
PREFERRED_TILE_B = 2048   # batch tile (lanes of output row / sublanes of x)
MIN_PALLAS_BATCH = 2048   # below this a fused XLA graph beats any custom kernel

# "NT" matmul: contract the last dim of both operands (A @ B^T on the MXU).
_NT_DIMS = (((1,), (1,)), ((), ()))


def _make_mlp_kernel(net_type):
    if net_type == "Relu":
        act = lambda h: jnp.maximum(h, jnp.float32(0.0))
    else:
        act = jnp.tanh

    def mlp_kernel(x_ref, w_ref, b_ref, o_ref):
        """One batch tile of the full MLP.

        x_ref: (TILE_B, IN_F)            natural HBM layout, batch on sublanes
        w_ref: (n_layers, F_PAD, F_PAD)  PyTorch (out, in) layout, zero-padded
        b_ref: (F_PAD, n_layers)         biases, zero-padded
        o_ref: (1, TILE_B)               lane-dense output row (batch on lanes)
        """
        n_layers = w_ref.shape[0]
        in_f = x_ref.shape[1]

        # Layer 0 fuses the (B, in) -> (in, B) transpose into the matmul:
        #   h[o, b] = sum_i W0[o, i] * x[b, i]      -> (F_PAD, TILE_B)
        w0 = w_ref[0]                                 # (F_PAD, F_PAD)
        h = lax.dot_general(w0[:, :in_f], x_ref[...], _NT_DIMS,
                            preferred_element_type=jnp.float32)
        h = act(h + b_ref[:, 0:1])

        # Hidden layers: h stays (F_PAD, TILE_B), features on sublanes.
        for li in range(1, n_layers - 1):             # unrolled at trace time
            h = jnp.dot(w_ref[li], h, preferred_element_type=jnp.float32)
            h = act(h + b_ref[:, li:li + 1])

        # Output layer (no activation): only output row 0 is live.
        li = n_layers - 1
        w_last = w_ref[li]                             # (F_PAD, F_PAD)
        row = jnp.dot(w_last[0:1, :], h, preferred_element_type=jnp.float32)
        o_ref[...] = (row + b_ref[0:1, li:li + 1]).astype(o_ref.dtype)

    return mlp_kernel


def _round_up(v, m):
    return ((v + m - 1) // m) * m


def _choose_tile(batch):
    """Lane-aligned batch tile: as large as PREFERRED_TILE_B, capped so the
    grid keeps >= 2 blocks once the batch allows it (v7x megacore split)."""
    half = _round_up(pl.cdiv(batch, 2), 128)
    return max(128, min(PREFERRED_TILE_B, half))


def _forward_pallas_row(x, w_slab, b_slab, net_type):
    """Pallas path: returns the lane-dense (1, b_pad) output row."""
    batch, in_features = x.shape
    n_layers, f_pad, _ = w_slab.shape
    tile_b = _choose_tile(batch)
    b_pad = _round_up(batch, tile_b)
    n_blocks = b_pad // tile_b

    return pl.pallas_call(
        _make_mlp_kernel(net_type),
        out_shape=jax.ShapeDtypeStruct((1, b_pad), jnp.float32),
        grid_spec=pltpu.PrefetchScalarGridSpec(
            num_scalar_prefetch=0,
            grid=(n_blocks,),
            in_specs=[
                # x in natural (B, in_features) layout; last dim == full array
                # dim so the (8,128) rule holds.  The ragged final block only
                # fills the valid rows; stale rows feed output lanes beyond
                # `batch`, which the wrapper slices off.
                pl.BlockSpec((tile_b, in_features), lambda i: (i, 0)),
                # packed weights / biases: same block every step -> VMEM-resident
                pl.BlockSpec((n_layers, f_pad, f_pad), lambda i: (0, 0, 0)),
                pl.BlockSpec((f_pad, n_layers), lambda i: (0, 0)),
            ],
            out_specs=pl.BlockSpec((1, tile_b), lambda i: (0, i)),
        ),
        compiler_params=pltpu.CompilerParams(
            dimension_semantics=("parallel",)),   # megacore split on v7x
    )(x.astype(jnp.float32), w_slab, b_slab)


def _forward_xla(x, w_slab, b_slab, net_type):
    """Fused pure-XLA path for small batches (launch overhead dominates)."""
    n_layers = w_slab.shape[0]
    h = x.astype(jnp.float32)
    h = jnp.pad(h, ((0, 0), (0, w_slab.shape[2] - h.shape[1])))
    for li in range(n_layers):
        h = h @ w_slab[li].T + b_slab[:, li]
        if li != n_layers - 1:
            h = jnp.maximum(h, 0.0) if net_type == "Relu" else jnp.tanh(h)
    return h[:, :1]


@functools.partial(jax.jit, static_argnames=("net_type", "use_pallas"))
def net_forward(x, w_slab, b_slab, *, net_type="Relu", use_pallas=None):
    """Forward pass of `Net` -> (batch, 1), matching the PyTorch module."""
    batch = x.shape[0]
    if use_pallas is None:
        use_pallas = batch >= MIN_PALLAS_BATCH
    if not use_pallas:
        return _forward_xla(x, w_slab, b_slab, net_type)
    row = _forward_pallas_row(x, w_slab, b_slab, net_type)
    # Consumers that can accept the lane-dense (1, batch) layout should call
    # _forward_pallas_row directly and skip this slice/reshape pass.
    return row[0, :batch].reshape(batch, 1)


def make_params(key, depth=3, width=5, in_features=5, net_type="Relu"):
    """Synthetic init mirroring Net.__init__ layer shapes.

    W is in torch.nn.Linear layout (out_features, in_features); b is (out,).
    Note: Net.init_weights uses kaiming_normal_(mode='fan_out'), hence
    std = sqrt(2 / fan_out) for the Relu net.
    """
    dims = [(width, in_features)]
    for _ in range(1, depth):
        dims.append((width, width))
    dims.append((1, width))

    params = []
    for fan_out, fan_in in dims:
        key, wk, bk = jax.random.split(key, 3)
        if net_type == "Relu":
            std = jnp.sqrt(2.0 / fan_out)                 # kaiming, fan_out mode
        else:
            std = jnp.sqrt(2.0 / (fan_in + fan_out))      # xavier_normal_
        w = jax.random.normal(wk, (fan_out, fan_in), dtype=jnp.float32) * std
        b = jax.random.normal(bk, (fan_out,), dtype=jnp.float32) * 0.1
        params.append((w, b))
    return params


def pack_params(params, f_pad=F_PAD):
    """Pack per-layer (W, b) into one weight slab and one bias slab."""
    n = len(params)
    w_slab = jnp.zeros((n, f_pad, f_pad), dtype=jnp.float32)
    b_slab = jnp.zeros((f_pad, n), dtype=jnp.float32)
    for li, (w, b) in enumerate(params):
        out_f, in_f = w.shape
        w_slab = w_slab.at[li, :out_f, :in_f].set(w)
        b_slab = b_slab.at[:out_f, li].set(b)
    return w_slab, b_slab


def net_forward_ref(x, params, net_type="Relu"):
    """Pure-JAX reference matching the PyTorch module semantics."""
    h = x.astype(jnp.float32)
    for i, (w, b) in enumerate(params):
        h = h @ w.T + b
        if i != len(params) - 1:
            h = jnp.maximum(h, 0.0) if net_type == "Relu" else jnp.tanh(h)
    return h


if __name__ == "__main__":
    key = jax.random.PRNGKey(0)
    key, xk, xk2 = jax.random.split(key, 3)

    depth, width, in_features = 3, 5, 5
    params = make_params(key, depth=depth, width=width,
                         in_features=in_features, net_type="Relu")
    w_slab, b_slab = pack_params(params)

    # Small batch, forced through the Pallas kernel (single 128-lane block).
    batch = 8
    x = jax.random.normal(xk, (batch, in_features), dtype=jnp.float32)
    out = jax.block_until_ready(net_forward(x, w_slab, b_slab, use_pallas=True))
    ref = net_forward_ref(x, params)
    assert out.shape == (batch, 1), out.shape
    assert jnp.allclose(out, ref, atol=1e-5, rtol=1e-5), (out, ref)

    # Same inputs through the default dispatch (small batch -> fused XLA path).
    out_xla = jax.block_until_ready(net_forward(x, w_slab, b_slab))
    assert jnp.allclose(out_xla, ref, atol=1e-5, rtol=1e-5)

    # Larger batch: natural Pallas path, multi-block grid + ragged tail.
    batch2 = 4100
    x2 = jax.random.normal(xk2, (batch2, in_features), dtype=jnp.float32)
    out2 = jax.block_until_ready(net_forward(x2, w_slab, b_slab))
    ref2 = net_forward_ref(x2, params)
    assert out2.shape == (batch2, 1), out2.shape
    assert jnp.allclose(out2, ref2, atol=1e-5, rtol=1e-5)

    print("KERNEL_OK")
</pallas_src>

<mosaic_0001>
module attributes {stable_mosaic.version = 11 : i64} {
  func.func @mlp_kernel(%arg0: i32, %arg1: memref<128x5xf32, #tpu.memory_space<vmem>>, %arg2: memref<4x8x8xf32, #tpu.memory_space<vmem>>, %arg3: memref<8x4xf32, #tpu.memory_space<vmem>>, %arg4: memref<1x128xf32, #tpu.memory_space<vmem>>) attributes {dimension_semantics = [#tpu.dimension_semantics<parallel>], iteration_bounds = array<i64: 1>, scalar_prefetch = 0 : i64, scratch_operands = 0 : i64, tpu.core_type = #tpu.core_type<tc>, window_params = [{transform_indices = @transform_0, window_bounds = array<i64: 128, 5>}, {pipeline_mode = #tpu.pipeline_mode<synchronous>, transform_indices = @transform_1, window_bounds = array<i64: 4, 8, 8>}, {pipeline_mode = #tpu.pipeline_mode<synchronous>, transform_indices = @transform_2, window_bounds = array<i64: 8, 4>}, {transform_indices = @transform_3, window_bounds = array<i64: 1, 128>}]} {
    %c0 = arith.constant 0 : index
    %c0_0 = arith.constant 0 : index
    %c0_1 = arith.constant 0 : index
    %0 = vector.load %arg2[%c0, %c0_0, %c0_1] : memref<4x8x8xf32, #tpu.memory_space<vmem>>, vector<1x8x8xf32>
    %1 = vector.shape_cast %0 : vector<1x8x8xf32> to vector<8x8xf32>
    %2 = vector.extract_strided_slice %1 {offsets = [0, 0], sizes = [8, 5], strides = [1, 1]} : vector<8x8xf32> to vector<8x5xf32>
    %c0_2 = arith.constant 0 : index
    %c0_3 = arith.constant 0 : index
    %3 = vector.load %arg1[%c0_2, %c0_3] : memref<128x5xf32, #tpu.memory_space<vmem>>, vector<128x5xf32>
    %cst = arith.constant dense<0.000000e+00> : vector<8x128xf32>
    %4 = tpu.matmul %2, %3, %cst {dimension_numbers = #tpu.dot_dimension_numbers<[1], [1], [0], [0], [0, 0, 1, 0], [], []>} : vector<8x5xf32>, vector<128x5xf32>, vector<8x128xf32> -> vector<8x128xf32>
    %c0_4 = arith.constant 0 : index
    %c0_5 = arith.constant 0 : index
    %5 = vector.load %arg3[%c0_4, %c0_5] : memref<8x4xf32, #tpu.memory_space<vmem>>, vector<8x1xf32>
    %6 = vector.broadcast %5 : vector<8x1xf32> to vector<8x128xf32>
    %7 = arith.addf %4, %6 : vector<8x128xf32>
    %cst_6 = arith.constant 0.000000e+00 : f32
    %8 = vector.broadcast %cst_6 : f32 to vector<8x128xf32>
    %9 = arith.maximumf %7, %8 : vector<8x128xf32>
    %c1 = arith.constant 1 : index
    %c0_7 = arith.constant 0 : index
    %c0_8 = arith.constant 0 : index
    %10 = vector.load %arg2[%c1, %c0_7, %c0_8] : memref<4x8x8xf32, #tpu.memory_space<vmem>>, vector<1x8x8xf32>
    %11 = vector.shape_cast %10 : vector<1x8x8xf32> to vector<8x8xf32>
    %cst_9 = arith.constant dense<0.000000e+00> : vector<8x128xf32>
    %12 = tpu.matmul %11, %9, %cst_9 {dimension_numbers = #tpu.dot_dimension_numbers<[1], [0], [0], [1], [0, 0, 1, 1], [], []>} : vector<8x8xf32>, vector<8x128xf32>, vector<8x128xf32> -> vector<8x128xf32>
    %c0_10 = arith.constant 0 : index
    %c1_11 = arith.constant 1 : index
    %13 = vector.load %arg3[%c0_10, %c1_11] : memref<8x4xf32, #tpu.memory_space<vmem>>, vector<8x1xf32>
    %14 = vector.broadcast %13 : vector<8x1xf32> to vector<8x128xf32>
    %15 = arith.addf %12, %14 : vector<8x128xf32>
    %cst_12 = arith.constant 0.000000e+00 : f32
    %16 = vector.broadcast %cst_12 : f32 to vector<8x128xf32>
    %17 = arith.maximumf %15, %16 : vector<8x128xf32>
    %c2 = arith.constant 2 : index
    %c0_13 = arith.constant 0 : index
    %c0_14 = arith.constant 0 : index
    %18 = vector.load %arg2[%c2, %c0_13, %c0_14] : memref<4x8x8xf32, #tpu.memory_space<vmem>>, vector<1x8x8xf32>
    %19 = vector.shape_cast %18 : vector<1x8x8xf32> to vector<8x8xf32>
    %cst_15 = arith.constant dense<0.000000e+00> : vector<8x128xf32>
    %20 = tpu.matmul %19, %17, %cst_15 {dimension_numbers = #tpu.dot_dimension_numbers<[1], [0], [0], [1], [0, 0, 1, 1], [], []>} : vector<8x8xf32>, vector<8x128xf32>, vector<8x128xf32> -> vector<8x128xf32>
    %c0_16 = arith.constant 0 : index
    %c2_17 = arith.constant 2 : index
    %21 = vector.load %arg3[%c0_16, %c2_17] : memref<8x4xf32, #tpu.memory_space<vmem>>, vector<8x1xf32>
    %22 = vector.broadcast %21 : vector<8x1xf32> to vector<8x128xf32>
    %23 = arith.addf %20, %22 : vector<8x128xf32>
    %cst_18 = arith.constant 0.000000e+00 : f32
    %24 = vector.broadcast %cst_18 : f32 to vector<8x128xf32>
    %25 = arith.maximumf %23, %24 : vector<8x128xf32>
    %c3 = arith.constant 3 : index
    %c0_19 = arith.constant 0 : index
    %c0_20 = arith.constant 0 : index
    %26 = vector.load %arg2[%c3, %c0_19, %c0_20] : memref<4x8x8xf32, #tpu.memory_space<vmem>>, vector<1x8x8xf32>
    %27 = vector.shape_cast %26 : vector<1x8x8xf32> to vector<8x8xf32>
    %28 = vector.extract_strided_slice %27 {offsets = [0, 0], sizes = [1, 8], strides = [1, 1]} : vector<8x8xf32> to vector<1x8xf32>
    %cst_21 = arith.constant dense<0.000000e+00> : vector<1x128xf32>
    %29 = tpu.matmul %28, %25, %cst_21 {dimension_numbers = #tpu.dot_dimension_numbers<[1], [0], [0], [1], [0, 0, 1, 1], [], []>} : vector<1x8xf32>, vector<8x128xf32>, vector<1x128xf32> -> vector<1x128xf32>
    %c0_22 = arith.constant 0 : index
    %c3_23 = arith.constant 3 : index
    %30 = vector.load %arg3[%c0_22, %c3_23] : memref<8x4xf32, #tpu.memory_space<vmem>>, vector<1x1xf32>
    %31 = vector.broadcast %30 : vector<1x1xf32> to vector<1x128xf32>
    %32 = arith.addf %29, %31 : vector<1x128xf32>
    %c0_24 = arith.constant 0 : index
    %c0_25 = arith.constant 0 : index
    %33 = vector.load %arg4[%c0_24, %c0_25] : memref<1x128xf32, #tpu.memory_space<vmem>>, vector<1x128xf32>
    tpu.vector_store %arg4[%c0_24, %c0_25], %32 {strides = array<i32>} : memref<1x128xf32, #tpu.memory_space<vmem>>, vector<1x128xf32>,
    return
  }
  func.func @transform_0(%arg0: i32) -> (i32, i32) {
    %c0_i32 = arith.constant 0 : i32
    %c0_i32_0 = arith.constant 0 : i32
    return %arg0, %c0_i32 : i32, i32
  }
  func.func @transform_1(%arg0: i32) -> (i32, i32, i32) {
    %c0_i32 = arith.constant 0 : i32
    %c0_i32_0 = arith.constant 0 : i32
    %c0_i32_1 = arith.constant 0 : i32
    %c0_i32_2 = arith.constant 0 : i32
    return %c0_i32, %c0_i32_0, %c0_i32_1 : i32, i32, i32
  }
  func.func @transform_2(%arg0: i32) -> (i32, i32) {
    %c0_i32 = arith.constant 0 : i32
    %c0_i32_0 = arith.constant 0 : i32
    %c0_i32_1 = arith.constant 0 : i32
    return %c0_i32, %c0_i32_0 : i32, i32
  }
  func.func @transform_3(%arg0: i32) -> (i32, i32) {
    %c0_i32 = arith.constant 0 : i32
    %c0_i32_0 = arith.constant 0 : i32
    return %c0_i32, %arg0 : i32, i32
  }
}

</mosaic_0001>

<llo_original>
// kernel: net_forward.1
$region0: #{net_forward.1}
  #allocation0 [shape = 'u32[]', space=smem, size = 0x4, offset = 0x4, fixed_abs, tag = 'smem constant byte address 0x4 - core index']
  #allocation1 [shape = 'u32[144,128]{1,0:T(1,128)}', space=vmem, size = 0x12000, scoped, tag = 'internal scratch']
  %s0 = inlined_call_operand.vmem [shape: f32[8,5], index: 0, kind: input, shape index: {}]
  %s1 = inlined_call_operand.hbm [shape: f32[4,8,8], index: 1, kind: input, shape index: {}]
  %s2 = inlined_call_operand.vmem [shape: f32[8,4], index: 2, kind: input, shape index: {}]
  %s3 = inlined_call_operand.vmem [shape: f32[1,128], index: 3, kind: output, shape index: {}]
  %s4 = sld [smem:[#allocation0]]
  $region26: #{net_forward.1} parent=0
    _
  %s6 = ssub.s32 1, %s4
  %s7 = scalar_select 0, %s6, %s4
  $region1: #{net_forward.1} parent=0
    #allocation2 [shape = 'u8[16384]{0}', space=vmem, size = 0x4000, scoped, tag = 'input window, operand 1, single buffered']
    #allocation3 [shape = 's32[1]{0}', space=sflag, size = 0x4, scoped, tag = 'scoped memory for net_forward.1']
    %8 = vsyncpa [#allocation3], 0
    // Predicated region
    $region2: #{net_forward.1} parent=1 // pred_check
      _
    $region3: #{net_forward.1} parent=1 // pred_check_branch
      %10 = sbr.rel (0) target = $region5
    $region4: #{net_forward.1} parent=1 // pred_region
      _
    $region5: #{net_forward.1} parent=1 // pred_fallthru
      _
    // Predicated region
    $region6: #{net_forward.1} parent=1 // pred_check
      _
    $region7: #{net_forward.1} parent=1 // pred_check_branch
      %12 = sbr.rel (0) target = $region9
    $region8: #{net_forward.1} parent=1 // pred_region
      %s14 = ssub.s32 512, 512
      %15 = vsyncadd [#allocation3], %s14
      %s16 = sshll.u32 [#allocation2], 4
      %s17 = int_to_ptr.vmem [resolvable:$true] %s16
      %22 = dma.hbm_to_vmem [thread:$0]  %s1, 512, %s17, [#allocation3], 128, 128, 8
    $region9: #{net_forward.1} parent=1 // pred_fallthru
      _
    // Predicated region
    $region10: #{net_forward.1} parent=1 // pred_check
      _
    $region11: #{net_forward.1} parent=1 // pred_check_branch
      %24 = sbr.rel (0) target = $region13
    $region12: #{net_forward.1} parent=1 // pred_region
      _
    $region13: #{net_forward.1} parent=1 // pred_fallthru
      _
    // Predicated region
    $region14: #{net_forward.1} parent=1 // pred_check
      _
    $region15: #{net_forward.1} parent=1 // pred_check_branch
      %26 = sbr.rel (0) target = $region17
    $region16: #{net_forward.1} parent=1 // pred_region
      %27 = dma.done [#allocation3], 512
    $region17: #{net_forward.1} parent=1 // pred_fallthru
      _
    %v28 = vld [vmem:[#allocation2] sm:$0xff]
    %v29 = vld [vmem:[%s0] sm:$0xff]
    %v30 = vld [vmem:[%s0 + $0x8] sm:$0xff]
    %v31 = vld [vmem:[%s0 + $0x10] sm:$0xff]
    %v32 = vld [vmem:[%s0 + $0x18] sm:$0xff]
    %v33 = vld [vmem:[%s0 + $0x20] sm:$0xff]
    %v34 = vld [vmem:[%s0 + $0x28] sm:$0xff]
    %v35 = vld [vmem:[%s0 + $0x30] sm:$0xff]
    %v36 = vld [vmem:[%s0 + $0x38] sm:$0xff]
    %v37 = vld [vmem:[%s0 + $0x40] sm:$0xff]
    %v38 = vld [vmem:[%s0 + $0x48] sm:$0xff]
    %v39 = vld [vmem:[%s0 + $0x50] sm:$0xff]
    %v40 = vld [vmem:[%s0 + $0x58] sm:$0xff]
    %v41 = vld [vmem:[%s0 + $0x60] sm:$0xff]
    %v42 = vld [vmem:[%s0 + $0x68] sm:$0xff]
    %v43 = vld [vmem:[%s0 + $0x70] sm:$0xff]
    %v44 = vld [vmem:[%s0 + $0x78] sm:$0xff]
    %v45 = vld [vmem:[%s2] sm:$0xff]
    %47 = vset.pattern.permute.xlu0 0
    %48 = vperm.xlu0 %47, %v45
    %v49 = vpop.permute.xlu0 %48
    %vm51 = vcmask 39936
    %v53 = vsel %vm51, %v28, 0
    %v56 = vsel %vm51, %v29, 0
    %v59 = vsel %vm51, %v30, 0
    %v62 = vsel %vm51, %v31, 0
    %v65 = vsel %vm51, %v32, 0
    %v68 = vsel %vm51, %v33, 0
    %v71 = vsel %vm51, %v34, 0
    %v74 = vsel %vm51, %v35, 0
    %v77 = vsel %vm51, %v36, 0
    %v80 = vsel %vm51, %v37, 0
    %v83 = vsel %vm51, %v38, 0
    %v86 = vsel %vm51, %v39, 0
    %v89 = vsel %vm51, %v40, 0
    %v92 = vsel %vm51, %v41, 0
    %v95 = vsel %vm51, %v42, 0
    %v98 = vsel %vm51, %v43, 0
    %v101 = vsel %vm51, %v44, 0
    %103 = vmatprep.subr.mxu0 0.0
    %104 = vmatpush1.xpose.msra.mxu0 %v101
    %105 = vmatprep.subr.mxu0 0.0
    %106 = vmatpush1.xpose.msra.mxu0 %v98
    %107 = vmatprep.subr.mxu0 0.0
    %108 = vmatpush1.xpose.msra.mxu0 %v95
    %109 = vmatprep.subr.mxu0 0.0
    %110 = vmatpush1.xpose.msra.mxu0 %v92
    %111 = vmatprep.subr.mxu0 0.0
    %112 = vmatpush1.xpose.msra.mxu0 %v89
    %113 = vmatprep.subr.mxu0 0.0
    %114 = vmatpush1.xpose.msra.mxu0 %v86
    %115 = vmatprep.subr.mxu0 0.0
    %116 = vmatpush1.xpose.msra.mxu0 %v83
    %117 = vmatprep.subr.mxu0 0.0
    %118 = vmatpush1.xpose.msra.mxu0 %v80
    %119 = vmatprep.subr.mxu0 0.0
    %120 = vmatpush1.xpose.msra.mxu0 %v77
    %121 = vmatprep.subr.mxu0 0.0
    %122 = vmatpush1.xpose.msra.mxu0 %v74
    %123 = vmatprep.subr.mxu0 0.0
    %124 = vmatpush1.xpose.msra.mxu0 %v71
    %125 = vmatprep.subr.mxu0 0.0
    %126 = vmatpush1.xpose.msra.mxu0 %v68
    %127 = vmatprep.subr.mxu0 0.0
    %128 = vmatpush1.xpose.msra.mxu0 %v65
    %129 = vmatprep.subr.mxu0 0.0
    %130 = vmatpush1.xpose.msra.mxu0 %v62
    %131 = vmatprep.subr.mxu0 0.0
    %132 = vmatpush1.xpose.msra.mxu0 %v59
    %133 = vmatprep.subr.mxu0 0.0
    %134 = vmatpush1.xpose.msra.mxu0 %v56
    %135 = vmatprep.subr.mxu0 0.0
    %136 = vmatpush2.xpose.msra.mxu0 0.0
    %137 = vmatprep.subr.mxu0 0.0
    %138 = vmatpush2.xpose.msra.mxu0 0.0
    %139 = vmatprep.subr.mxu0 0.0
    %140 = vmatpush2.xpose.msra.mxu0 0.0
    %141 = vmatprep.subr.mxu0 0.0
    %142 = vmatpush2.xpose.msra.mxu0 0.0
    %143 = vmatprep.subr.mxu0 0.0
    %144 = vmatpush2.xpose.msra.mxu0 0.0
    %145 = vmatprep.subr.mxu0 0.0
    %146 = vmatpush2.xpose.msra.mxu0 0.0
    %147 = vmatprep.subr.mxu0 0.0
    %148 = vmatpush2.xpose.msra.mxu0 0.0
    %149 = vmatprep.subr.mxu0 0.0
    %150 = vmatpush2.xpose.msra.mxu0 0.0
    %151 = vmatprep.subr.mxu0 0.0
    %152 = vmatpush2.xpose.msra.mxu0 0.0
    %153 = vmatprep.subr.mxu0 0.0
    %154 = vmatpush2.xpose.msra.mxu0 0.0
    %155 = vmatprep.subr.mxu0 0.0
    %156 = vmatpush2.xpose.msra.mxu0 0.0
    %157 = vmatprep.subr.mxu0 0.0
    %158 = vmatpush2.xpose.msra.mxu0 0.0
    %159 = vmatprep.subr.mxu0 0.0
    %160 = vmatpush2.xpose.msra.mxu0 0.0
    %161 = vmatprep.subr.mxu0 0.0
    %162 = vmatpush2.xpose.msra.mxu0 0.0
    %163 = vmatprep.subr.mxu0 0.0
    %164 = vmatpush2.xpose.msra.mxu0 0.0
    %165 = vmatprep.subr.mxu0 0.0
    %166 = vmatpush2.xpose.msra.mxu0 0.0
    %167 = vmatprep.mubr.f32.mxu0 0.0
    %168 = vmatmul.mubr.f32.gmra.mxu0 %v53
    %v169 = vpop.f32.mrf.mxu0
    %v170 = vadd.f32 %v49, %v169
    %v171 = vpop.f32.mrf.mxu0
    %172 = vdwg.mxu0
    %v173 = vmax.f32 %v170, 0.0
    %s174 = scalar_lea.vmem [#allocation2], 8
    %v175 = vld [vmem:[%s174] sm:$0xff]
    %176 = vset.pattern.permute.xlu0 1
    %177 = vperm.xlu0 %176, %v45
    %v178 = vpop.permute.xlu0 %177
    %vm180 = vcmask 64512
    %v182 = vsel %vm180, %v175, 0
    %184 = vmatprep.subr.mxu0 0.0
    %185 = vmatpush1.msra.mxu0 0.0
    %186 = vmatprep.subr.mxu0 0.0
    %187 = vmatpush1.msra.mxu0 0.0
    %188 = vmatprep.subr.mxu0 0.0
    %189 = vmatpush1.msra.mxu0 0.0
    %190 = vmatprep.subr.mxu0 0.0
    %191 = vmatpush1.msra.mxu0 0.0
    %192 = vmatprep.subr.mxu0 0.0
    %193 = vmatpush1.msra.mxu0 0.0
    %194 = vmatprep.subr.mxu0 0.0
    %195 = vmatpush1.msra.mxu0 0.0
    %196 = vmatprep.subr.mxu0 0.0
    %197 = vmatpush1.msra.mxu0 0.0
    %198 = vmatprep.subr.mxu0 0.0
    %199 = vmatpush1.msra.mxu0 0.0
    %200 = vmatprep.subr.mxu0 0.0
    %201 = vmatpush1.msra.mxu0 0.0
    %202 = vmatprep.subr.mxu0 0.0
    %203 = vmatpush1.msra.mxu0 0.0
    %204 = vmatprep.subr.mxu0 0.0
    %205 = vmatpush1.msra.mxu0 0.0
    %206 = vmatprep.subr.mxu0 0.0
    %207 = vmatpush1.msra.mxu0 0.0
    %208 = vmatprep.subr.mxu0 0.0
    %209 = vmatpush1.msra.mxu0 0.0
    %210 = vmatprep.subr.mxu0 0.0
    %211 = vmatpush1.msra.mxu0 0.0
    %212 = vmatprep.subr.mxu0 0.0
    %213 = vmatpush1.msra.mxu0 0.0
    %214 = vmatprep.subr.mxu0 0.0
    %215 = vmatpush1.msra.mxu0 %v173
    %216 = vmatprep.subr.mxu0 0.0
    %217 = vmatpush2.msra.mxu0 0.0
    %218 = vmatprep.subr.mxu0 0.0
    %219 = vmatpush2.msra.mxu0 0.0
    %220 = vmatprep.subr.mxu0 0.0
    %221 = vmatpush2.msra.mxu0 0.0
    %222 = vmatprep.subr.mxu0 0.0
    %223 = vmatpush2.msra.mxu0 0.0
    %224 = vmatprep.subr.mxu0 0.0
    %225 = vmatpush2.msra.mxu0 0.0
    %226 = vmatprep.subr.mxu0 0.0
    %227 = vmatpush2.msra.mxu0 0.0
    %228 = vmatprep.subr.mxu0 0.0
    %229 = vmatpush2.msra.mxu0 0.0
    %230 = vmatprep.subr.mxu0 0.0
    %231 = vmatpush2.msra.mxu0 0.0
    %232 = vmatprep.subr.mxu0 0.0
    %233 = vmatpush2.msra.mxu0 0.0
    %234 = vmatprep.subr.mxu0 0.0
    %235 = vmatpush2.msra.mxu0 0.0
    %236 = vmatprep.subr.mxu0 0.0
    %237 = vmatpush2.msra.mxu0 0.0
    %238 = vmatprep.subr.mxu0 0.0
    %239 = vmatpush2.msra.mxu0 0.0
    %240 = vmatprep.subr.mxu0 0.0
    %241 = vmatpush2.msra.mxu0 0.0
    %242 = vmatprep.subr.mxu0 0.0
    %243 = vmatpush2.msra.mxu0 0.0
    %244 = vmatprep.subr.mxu0 0.0
    %245 = vmatpush2.msra.mxu0 0.0
    %246 = vmatprep.subr.mxu0 0.0
    %247 = vmatpush2.msra.mxu0 0.0
    %248 = vmatprep.mubr.f32.mxu0 0.0
    %249 = vmatmul.mubr.f32.gmra.mxu0 %v182
    %v250 = vpop.f32.mrf.mxu0
    %v251 = vadd.f32 %v178, %v250
    %v252 = vpop.f32.mrf.mxu0
    %253 = vdwg.mxu0
    %v254 = vmax.f32 %v251, 0.0
    %s255 = scalar_lea.vmem [#allocation2], 16
    %v256 = vld [vmem:[%s255] sm:$0xff]
    %257 = vset.pattern.permute.xlu0 2
    %258 = vperm.xlu0 %257, %v45
    %v259 = vpop.permute.xlu0 %258
    %v262 = vsel %vm180, %v256, 0
    %264 = vmatprep.subr.mxu0 0.0
    %265 = vmatpush1.msra.mxu0 0.0
    %266 = vmatprep.subr.mxu0 0.0
    %267 = vmatpush1.msra.mxu0 0.0
    %268 = vmatprep.subr.mxu0 0.0
    %269 = vmatpush1.msra.mxu0 0.0
    %270 = vmatprep.subr.mxu0 0.0
    %271 = vmatpush1.msra.mxu0 0.0
    %272 = vmatprep.subr.mxu0 0.0
    %273 = vmatpush1.msra.mxu0 0.0
    %274 = vmatprep.subr.mxu0 0.0
    %275 = vmatpush1.msra.mxu0 0.0
    %276 = vmatprep.subr.mxu0 0.0
    %277 = vmatpush1.msra.mxu0 0.0
    %278 = vmatprep.subr.mxu0 0.0
    %279 = vmatpush1.msra.mxu0 0.0
    %280 = vmatprep.subr.mxu0 0.0
    %281 = vmatpush1.msra.mxu0 0.0
    %282 = vmatprep.subr.mxu0 0.0
    %283 = vmatpush1.msra.mxu0 0.0
    %284 = vmatprep.subr.mxu0 0.0
    %285 = vmatpush1.msra.mxu0 0.0
    %286 = vmatprep.subr.mxu0 0.0
    %287 = vmatpush1.msra.mxu0 0.0
    %288 = vmatprep.subr.mxu0 0.0
    %289 = vmatpush1.msra.mxu0 0.0
    %290 = vmatprep.subr.mxu0 0.0
    %291 = vmatpush1.msra.mxu0 0.0
    %292 = vmatprep.subr.mxu0 0.0
    %293 = vmatpush1.msra.mxu0 0.0
    %294 = vmatprep.subr.mxu0 0.0
    %295 = vmatpush1.msra.mxu0 %v254
    %296 = vmatprep.subr.mxu0 0.0
    %297 = vmatpush2.msra.mxu0 0.0
    %298 = vmatprep.subr.mxu0 0.0
    %299 = vmatpush2.msra.mxu0 0.0
    %300 = vmatprep.subr.mxu0 0.0
    %301 = vmatpush2.msra.mxu0 0.0
    %302 = vmatprep.subr.mxu0 0.0
    %303 = vmatpush2.msra.mxu0 0.0
    %304 = vmatprep.subr.mxu0 0.0
    %305 = vmatpush2.msra.mxu0 0.0
    %306 = vmatprep.subr.mxu0 0.0
    %307 = vmatpush2.msra.mxu0 0.0
    %308 = vmatprep.subr.mxu0 0.0
    %309 = vmatpush2.msra.mxu0 0.0
    %310 = vmatprep.subr.mxu0 0.0
    %311 = vmatpush2.msra.mxu0 0.0
    %312 = vmatprep.subr.mxu0 0.0
    %313 = vmatpush2.msra.mxu0 0.0
    %314 = vmatprep.subr.mxu0 0.0
    %315 = vmatpush2.msra.mxu0 0.0
    %316 = vmatprep.subr.mxu0 0.0
    %317 = vmatpush2.msra.mxu0 0.0
    %318 = vmatprep.subr.mxu0 0.0
    %319 = vmatpush2.msra.mxu0 0.0
    %320 = vmatprep.subr.mxu0 0.0
    %321 = vmatpush2.msra.mxu0 0.0
    %322 = vmatprep.subr.mxu0 0.0
    %323 = vmatpush2.msra.mxu0 0.0
    %324 = vmatprep.subr.mxu0 0.0
    %325 = vmatpush2.msra.mxu0 0.0
    %326 = vmatprep.subr.mxu0 0.0
    %327 = vmatpush2.msra.mxu0 0.0
    %328 = vmatprep.mubr.f32.mxu0 0.0
    %329 = vmatmul.mubr.f32.gmra.mxu0 %v262
    %v330 = vpop.f32.mrf.mxu0
    %v331 = vadd.f32 %v259, %v330
    %v332 = vpop.f32.mrf.mxu0
    %333 = vdwg.mxu0
    %v334 = vmax.f32 %v331, 0.0
    %s335 = scalar_lea.vmem [#allocation2], 24
    %v336 = vld [vmem:[%s335] sm:$0xff]
    %v337 = vld [vmem:[%s2] sm:$0x1]
    %339 = vset.pattern.permute.xlu0 3
    %340 = vperm.xlu0 %339, %v337
    %v341 = vpop.permute.xlu0 %340
    %v344 = vsel %vm180, %v336, 0
    %346 = vmatprep.subr.mxu0 0.0
    %347 = vmatpush1.msra.mxu0 0.0
    %348 = vmatprep.subr.mxu0 0.0
    %349 = vmatpush1.msra.mxu0 0.0
    %350 = vmatprep.subr.mxu0 0.0
    %351 = vmatpush1.msra.mxu0 0.0
    %352 = vmatprep.subr.mxu0 0.0
    %353 = vmatpush1.msra.mxu0 0.0
    %354 = vmatprep.subr.mxu0 0.0
    %355 = vmatpush1.msra.mxu0 0.0
    %356 = vmatprep.subr.mxu0 0.0
    %357 = vmatpush1.msra.mxu0 0.0
    %358 = vmatprep.subr.mxu0 0.0
    %359 = vmatpush1.msra.mxu0 0.0
    %360 = vmatprep.subr.mxu0 0.0
    %361 = vmatpush1.msra.mxu0 0.0
    %362 = vmatprep.subr.mxu0 0.0
    %363 = vmatpush1.msra.mxu0 0.0
    %364 = vmatprep.subr.mxu0 0.0
    %365 = vmatpush1.msra.mxu0 0.0
    %366 = vmatprep.subr.mxu0 0.0
    %367 = vmatpush1.msra.mxu0 0.0
    %368 = vmatprep.subr.mxu0 0.0
    %369 = vmatpush1.msra.mxu0 0.0
    %370 = vmatprep.subr.mxu0 0.0
    %371 = vmatpush1.msra.mxu0 0.0
    %372 = vmatprep.subr.mxu0 0.0
    %373 = vmatpush1.msra.mxu0 0.0
    %374 = vmatprep.subr.mxu0 0.0
    %375 = vmatpush1.msra.mxu0 0.0
    %376 = vmatprep.subr.mxu0 0.0
    %377 = vmatpush1.msra.mxu0 %v334
    %378 = vmatprep.subr.mxu0 0.0
    %379 = vmatpush2.msra.mxu0 0.0
    %380 = vmatprep.subr.mxu0 0.0
    %381 = vmatpush2.msra.mxu0 0.0
    %382 = vmatprep.subr.mxu0 0.0
    %383 = vmatpush2.msra.mxu0 0.0
    %384 = vmatprep.subr.mxu0 0.0
    %385 = vmatpush2.msra.mxu0 0.0
    %386 = vmatprep.subr.mxu0 0.0
    %387 = vmatpush2.msra.mxu0 0.0
    %388 = vmatprep.subr.mxu0 0.0
    %389 = vmatpush2.msra.mxu0 0.0
    %390 = vmatprep.subr.mxu0 0.0
    %391 = vmatpush2.msra.mxu0 0.0
    %392 = vmatprep.subr.mxu0 0.0
    %393 = vmatpush2.msra.mxu0 0.0
    %394 = vmatprep.subr.mxu0 0.0
    %395 = vmatpush2.msra.mxu0 0.0
    %396 = vmatprep.subr.mxu0 0.0
    %397 = vmatpush2.msra.mxu0 0.0
    %398 = vmatprep.subr.mxu0 0.0
    %399 = vmatpush2.msra.mxu0 0.0
    %400 = vmatprep.subr.mxu0 0.0
    %401 = vmatpush2.msra.mxu0 0.0
    %402 = vmatprep.subr.mxu0 0.0
    %403 = vmatpush2.msra.mxu0 0.0
    %404 = vmatprep.subr.mxu0 0.0
    %405 = vmatpush2.msra.mxu0 0.0
    %406 = vmatprep.subr.mxu0 0.0
    %407 = vmatpush2.msra.mxu0 0.0
    %408 = vmatprep.subr.mxu0 0.0
    %409 = vmatpush2.msra.mxu0 0.0
    %410 = vmatprep.mubr.f32.mxu0 0.0
    %411 = vmatmul.mubr.f32.gmra.mxu0 %v344
    %v412 = vpop.f32.mrf.mxu0
    %v413 = vadd.f32 %v341, %v412
    %v414 = vpop.f32.mrf.mxu0
    %415 = vdwg.mxu0
    %416 = vst [vmem:[%s3] sm:$0x1] %v413
    // Predicated region
    $region18: #{net_forward.1} parent=1 // pred_check
      _
    $region19: #{net_forward.1} parent=1 // pred_check_branch
      %418 = sbr.rel (0) target = $region21
    $region20: #{net_forward.1} parent=1 // pred_region
      _
    $region21: #{net_forward.1} parent=1 // pred_fallthru
      _
    // Predicated region
    $region22: #{net_forward.1} parent=1 // pred_check
      _
    $region23: #{net_forward.1} parent=1 // pred_check_branch
      %420 = sbr.rel (0) target = $region25
    $region24: #{net_forward.1} parent=1 // pred_region
      _
    $region25: #{net_forward.1} parent=1 // pred_fallthru
      _
    %421 = vsyncpa [#allocation3], 1

</llo_original>
